<compile_context>
chip_gen: v7x
topology: tpu7x:2x2x1
jax: 0.10.0
libtpu: 0.0.40
codegen_flags: <defaults>
</compile_context>

<pallas_src>
import math
import functools

import jax
import jax.numpy as jnp
from jax import lax
from jax.experimental import pallas as pl
from jax.experimental.pallas import tpu as pltpu

MiB = 1024 * 1024
_broadcast_to = getattr(pl, "broadcast_to", jnp.broadcast_to)


# --------------------------------------------------------------------------- #
# helpers
# --------------------------------------------------------------------------- #
def _pick_tile(T, max_tile):
    """Largest power-of-two tile >= 128 that divides T, else the whole sequence."""
    t = max_tile
    while t >= 128:
        if T % t == 0:
            return t
        t //= 2
    return T


def _layer_norm(v, g, b, eps=1e-6):
    mu = jnp.mean(v, axis=-1, keepdims=True)
    var = jnp.mean(jnp.square(v - mu), axis=-1, keepdims=True)
    return (v - mu) * lax.rsqrt(var + eps) * g + b


def _single_buf_spec(shape, index_map):
    """BlockSpec for operands whose block index never changes (weights) or only
    changes with the outer batch axis (full-sequence K/V): single-buffered so
    they are not double-buffered in VMEM (matters on v7x's 64 MiB/TC)."""
    buffered = getattr(pl, "Buffered", None)
    if buffered is not None:
        try:
            return pl.BlockSpec(shape, index_map, pipeline_mode=buffered(1))
        except TypeError:            # older jax without pipeline_mode kwarg
            pass
    return pl.BlockSpec(shape, index_map)


def _vmem_cap_bytes():
    try:
        return int(pltpu.get_tpu_info().vmem_capacity_bytes)
    except Exception:                # conservative default: v7x per-TC VMEM
        return 64 * MiB


def _vmem_limit(resident_bytes):
    """2x headroom over the residency estimate, floored at 32 MiB and capped at
    87.5% of physical per-core VMEM (≈56 MiB on v7x, ≈112 MiB on v5e/v6e)."""
    cap = int(0.875 * _vmem_cap_bytes())
    return int(min(cap, max(32 * MiB, 2 * int(resident_bytes))))


def sinusoidal_pos_enc(T, H):
    pos = jnp.arange(T, dtype=jnp.float32)[:, None]
    div = jnp.exp(jnp.arange(0, H, 2, dtype=jnp.float32) * (-math.log(10000.0) / H))
    pe = jnp.zeros((T, H), jnp.float32)
    pe = pe.at[:, 0::2].set(jnp.sin(pos * div))
    pe = pe.at[:, 1::2].set(jnp.cos(pos * div))
    return pe


def prepare_params(params, *, n_head, weight_dtype=jnp.float32):
    """One-time parameter prep: concat Wk|Wv, fold 1/sqrt(d_k) into Wq/bq, and
    cast matmul weights to the MXU input dtype (f32 or bf16)."""
    def prep(p):
        H = p["wq"].shape[0]
        qs = 1.0 / math.sqrt(H // n_head)
        return dict(
            ln1_g=p["ln1_g"], ln1_b=p["ln1_b"],
            wq=(p["wq"] * qs).astype(weight_dtype),
            bq=(p["bq"] * qs).astype(jnp.float32),
            wkv=jnp.concatenate([p["wk"], p["wv"]], axis=1).astype(weight_dtype),
            bkv=jnp.concatenate([p["bk"], p["bv"]], axis=1).astype(jnp.float32),
            wo=p["wo"].astype(weight_dtype), bo=p["bo"].astype(jnp.float32),
            ln2_g=p["ln2_g"], ln2_b=p["ln2_b"],
            w1=p["w1"].astype(weight_dtype), b1=p["b1"].astype(jnp.float32),
            w2=p["w2"].astype(weight_dtype), b2=p["b2"].astype(jnp.float32),
        )
    return dict(layers=[prep(p) for p in params["layers"]],
                ln_g=params["ln_g"], ln_b=params["ln_b"])


# --------------------------------------------------------------------------- #
# kernel 1: (optional pos-enc) + pre-norm + fused K|V projection
# --------------------------------------------------------------------------- #
def _kv_body(x, ln_g, ln_b, wkv, bkv, k_ref, v_ref):
    H = x.shape[-1]
    y = _layer_norm(x, ln_g, ln_b)                              # f32 elementwise
    kv = jnp.dot(y.astype(wkv.dtype), wkv,
                 preferred_element_type=jnp.float32) + bkv      # one (Tq,H)@(H,2H)
    k_ref[0] = kv[:, :H].astype(k_ref.dtype)
    v_ref[0] = kv[:, H:].astype(v_ref.dtype)


def _kv_kernel(x_ref, ln_g_ref, ln_b_ref, wkv_ref, bkv_ref, k_ref, v_ref):
    _kv_body(x_ref[0], ln_g_ref[...], ln_b_ref[...],
             wkv_ref[...], bkv_ref[...], k_ref, v_ref)


def _kv_posenc_kernel(x_ref, pe_ref, ln_g_ref, ln_b_ref, wkv_ref, bkv_ref,
                      k_ref, v_ref, *, scale):
    x = x_ref[0] * scale + pe_ref[...]            # layer-0 prologue fused in
    _kv_body(x, ln_g_ref[...], ln_b_ref[...],
             wkv_ref[...], bkv_ref[...], k_ref, v_ref)


# --------------------------------------------------------------------------- #
# kernel 2: Q + attention + Wo + residual + pre-norm FFN + residual (+final LN)
# --------------------------------------------------------------------------- #
def _attn_ffn_kernel(*refs, n_head, pe_scale, has_pe, has_final_ln):
    refs = list(refs)
    x_ref = refs.pop(0)
    pe_ref = refs.pop(0) if has_pe else None
    (mask_ref, k_ref, v_ref,
     ln1_g_ref, ln1_b_ref, wq_ref, bq_ref, wo_ref, bo_ref,
     ln2_g_ref, ln2_b_ref, w1_ref, b1_ref, w2_ref, b2_ref) = refs[:15]
    refs = refs[15:]
    if has_final_ln:
        lnf_g_ref, lnf_b_ref = refs[:2]
        refs = refs[2:]
    out_ref = refs[0]

    x = x_ref[0]                                  # (Tq, H) f32 residual input
    if has_pe:
        x = x * pe_scale + pe_ref[...]            # layer-0 prologue fused in
    k = k_ref[0]                                  # (T, H) in MXU-input dtype
    v = v_ref[0]
    Tq, H = x.shape
    T = k.shape[0]
    d_k = H // n_head
    mdt = k.dtype                                 # MXU input dtype (f32 / bf16)

    # Q recomputed from the resident x tile; 1/sqrt(d_k) pre-folded into Wq/bq.
    y1 = _layer_norm(x, ln1_g_ref[...], ln1_b_ref[...])
    q = (jnp.dot(y1.astype(mdt), wq_ref[...],
                 preferred_element_type=jnp.float32) + bq_ref[...]).astype(mdt)

    # Additive key-padding bias: 0 for valid keys, -1e9 for padded keys.
    # Broadcast to (Tq, T) ONCE (JAX does not CSE broadcast_in_dim).
    mbias = _broadcast_to((mask_ref[0].astype(jnp.float32) - 1.0) * 1e9, (Tq, T))

    # Heads: static unroll (n_head is small); QK^T via dot_general so K is never
    # transposed; contexts concatenated in registers so the Wo input is one
    # lane-dense (Tq, H) value (no masked d_k-wide column stores).
    dn = (((1,), (1,)), ((), ()))                 # contract the shared d_k axis
    ctxs = []
    for h in range(n_head):
        sl = slice(h * d_k, (h + 1) * d_k)
        s = lax.dot_general(q[:, sl], k[:, sl], dimension_numbers=dn,
                            preferred_element_type=jnp.float32) + mbias
        s = s - jnp.max(s, axis=-1, keepdims=True)
        e = jnp.exp(s)                            # f32 softmax
        p = e * pl.reciprocal(jnp.sum(e, axis=-1, keepdims=True), approx=True)
        ctxs.append(jnp.dot(p.astype(mdt), v[:, sl],
                            preferred_element_type=jnp.float32))
    ctx = jnp.concatenate(ctxs, axis=-1)          # (Tq, H) f32, lane-dense

    att = jnp.dot(ctx.astype(mdt), wo_ref[...],
                  preferred_element_type=jnp.float32) + bo_ref[...]
    x1 = x + att                                  # residual 1 (f32)

    y2 = _layer_norm(x1, ln2_g_ref[...], ln2_b_ref[...])
    hdn = jnp.maximum(
        jnp.dot(y2.astype(mdt), w1_ref[...],
                preferred_element_type=jnp.float32) + b1_ref[...], 0.0)
    ffn = jnp.dot(hdn.astype(mdt), w2_ref[...],
                  preferred_element_type=jnp.float32) + b2_ref[...]
    out = x1 + ffn                                # residual 2 (f32)
    # TODO(synk): dropout is an eval-mode identity; training would need pltpu.prng_*.
    if has_final_ln:                              # encoder-final LayerNorm fused in
        out = _layer_norm(out, lnf_g_ref[...], lnf_b_ref[...])
    out_ref[0] = out.astype(out_ref.dtype)        # single lane-dense store


# --------------------------------------------------------------------------- #
# per-layer wrapper
# --------------------------------------------------------------------------- #
def encoder_layer(x, mask, p, *, n_head, pe=None, pe_scale=1.0, final_ln=None):
    """One pre-norm encoder layer.  x: (B,T,H) f32, mask: (B,1,T) int32.
    `pe` is only passed for layer 0 (fuses x*scale+pos_enc); `final_ln=(g,b)`
    is only passed for the last layer (fuses the encoder-final LayerNorm)."""
    B, T, H = x.shape
    F = p["w1"].shape[1]
    wdt = p["wq"].dtype                      # MXU input dtype (f32 or bf16)
    isz = jnp.dtype(wdt).itemsize

    Tq1 = _pick_tile(T, 512)                 # pass 1 is memory-bound -> big tiles
    Tq2 = _pick_tile(T, 256)                 # pass 2 holds full-seq K/V -> smaller

    # ---- pass 1: (posenc) + LN1 + fused K|V projection -----------------------
    act1 = pl.BlockSpec((1, Tq1, H), lambda b, t: (b, t, 0))
    in_specs1 = [act1]
    args1 = [x]
    if pe is not None:
        in_specs1.append(pl.BlockSpec((Tq1, H), lambda b, t: (t, 0)))
        args1.append(pe)
        kern1 = functools.partial(_kv_posenc_kernel, scale=pe_scale)
    else:
        kern1 = _kv_kernel
    in_specs1 += [
        _single_buf_spec((1, H), lambda b, t: (0, 0)),        # ln1 gamma
        _single_buf_spec((1, H), lambda b, t: (0, 0)),        # ln1 beta
        _single_buf_spec((H, 2 * H), lambda b, t: (0, 0)),    # Wk|Wv
        _single_buf_spec((1, 2 * H), lambda b, t: (0, 0)),    # bk|bv
    ]
    args1 += [p["ln1_g"], p["ln1_b"], p["wkv"], p["bkv"]]

    vmem1 = _vmem_limit(
        2 * H * H * isz + 4 * H * 4                           # weights (1-buffered)
        + (4 if pe is not None else 2) * Tq1 * H * 4          # x (+pe) tiles (2-buf)
        + 4 * Tq1 * H * isz                                   # K,V out tiles (2-buf)
        + 4 * Tq1 * H * 4)                                    # LN / proj temporaries
    k, v = pl.pallas_call(
        kern1,
        out_shape=(jax.ShapeDtypeStruct((B, T, H), wdt),) * 2,
        grid=(B, T // Tq1),
        in_specs=in_specs1,
        out_specs=(pl.BlockSpec((1, Tq1, H), lambda b, t: (b, t, 0)),) * 2,
        compiler_params=pltpu.CompilerParams(
            dimension_semantics=("parallel", "parallel"),
            vmem_limit_bytes=vmem1),
        cost_estimate=pl.CostEstimate(
            flops=int(4 * B * T * H * H),
            transcendentals=int(B * T),
            bytes_accessed=int(B * T * H * 4 + 2 * B * T * H * isz
                               + 2 * H * H * isz)),
    )(*args1)

    # ---- pass 2: Q + attention + Wo + residual + FFN + residual (+final LN) ---
    act2 = pl.BlockSpec((1, Tq2, H), lambda b, t: (b, t, 0))
    kv_spec = _single_buf_spec((1, T, H), lambda b, t: (b, 0, 0))
    has_pe = pe is not None
    has_fln = final_ln is not None

    in_specs2 = [act2]
    args2 = [x]
    if has_pe:
        in_specs2.append(pl.BlockSpec((Tq2, H), lambda b, t: (t, 0)))
        args2.append(pe)
    in_specs2 += [
        pl.BlockSpec((1, 1, T), lambda b, t: (b, 0, 0)),      # key-padding mask
        kv_spec, kv_spec,                                     # K, V (full sequence)
        _single_buf_spec((1, H), lambda b, t: (0, 0)),        # ln1 gamma
        _single_buf_spec((1, H), lambda b, t: (0, 0)),        # ln1 beta
        _single_buf_spec((H, H), lambda b, t: (0, 0)),        # Wq (scale folded)
        _single_buf_spec((1, H), lambda b, t: (0, 0)),        # bq
        _single_buf_spec((H, H), lambda b, t: (0, 0)),        # Wo
        _single_buf_spec((1, H), lambda b, t: (0, 0)),        # bo
        _single_buf_spec((1, H), lambda b, t: (0, 0)),        # ln2 gamma
        _single_buf_spec((1, H), lambda b, t: (0, 0)),        # ln2 beta
        _single_buf_spec((H, F), lambda b, t: (0, 0)),        # W1
        _single_buf_spec((1, F), lambda b, t: (0, 0)),        # b1
        _single_buf_spec((F, H), lambda b, t: (0, 0)),        # W2
        _single_buf_spec((1, H), lambda b, t: (0, 0)),        # b2
    ]
    args2 += [mask, k, v, p["ln1_g"], p["ln1_b"], p["wq"], p["bq"],
              p["wo"], p["bo"], p["ln2_g"], p["ln2_b"],
              p["w1"], p["b1"], p["w2"], p["b2"]]
    if has_fln:
        in_specs2 += [_single_buf_spec((1, H), lambda b, t: (0, 0)),
                      _single_buf_spec((1, H), lambda b, t: (0, 0))]
        args2 += [final_ln[0], final_ln[1]]

    wts2 = (2 * H * H + 2 * H * F) * isz + (8 * H + F) * 4
    kv_res = 2 * T * H * isz                                  # single-buffered K/V
    acts2 = (6 if has_pe else 4) * Tq2 * H * 4 + 2 * T * 4
    tmps2 = 2 * Tq2 * T * 4 + Tq2 * F * 4 + 5 * Tq2 * H * 4
    vmem2 = _vmem_limit(wts2 + kv_res + acts2 + tmps2)
    # TODO(synk): for very long T on v7x, add an "arbitrary" KV-tile grid axis
    # with flash-style online softmax instead of holding full-seq K/V in VMEM.
    out = pl.pallas_call(
        functools.partial(_attn_ffn_kernel, n_head=n_head, pe_scale=pe_scale,
                          has_pe=has_pe, has_final_ln=has_fln),
        out_shape=jax.ShapeDtypeStruct((B, T, H), x.dtype),
        grid=(B, T // Tq2),
        in_specs=in_specs2,
        out_specs=act2,
        compiler_params=pltpu.CompilerParams(
            dimension_semantics=("parallel", "parallel"),
            vmem_limit_bytes=vmem2),
        cost_estimate=pl.CostEstimate(
            flops=int(B * (4 * T * H * H + 4 * T * T * H + 4 * T * H * F)),
            transcendentals=int(B * (n_head * T * T + 4 * T)),
            bytes_accessed=int(2 * B * T * H * 4 + 2 * B * T * H * isz
                               + B * T * 4 + (2 * H * H + 2 * H * F) * isz)),
    )(*args2)
    return out


# --------------------------------------------------------------------------- #
# full encoder forward
# --------------------------------------------------------------------------- #
def encoder_forward(x, mask, prepared, *, n_head):
    """kosr Encoder forward with prepared params (see prepare_params)."""
    B, T, H = x.shape
    pe = sinusoidal_pos_enc(T, H)
    scale = math.sqrt(H)
    layers = prepared["layers"]
    if not layers:
        # TODO(synk): zero-layer encoder kept in plain JAX (never exercised here).
        h = x * scale + pe[None]
        return _layer_norm(h, prepared["ln_g"], prepared["ln_b"]), mask
    h = x
    last = len(layers) - 1
    for i, p in enumerate(layers):
        h = encoder_layer(
            h, mask, p, n_head=n_head,
            pe=pe if i == 0 else None, pe_scale=scale,
            final_ln=(prepared["ln_g"], prepared["ln_b"]) if i == last else None)
    return h, mask


# --------------------------------------------------------------------------- #
# pure-JAX reference (mirrors the PyTorch Encoder.forward, uses raw params)
# --------------------------------------------------------------------------- #
def encoder_forward_ref(x, mask, params, *, n_head):
    B, T, H = x.shape
    d_k = H // n_head

    def ln(v, g, b):
        mu = v.mean(-1, keepdims=True)
        var = ((v - mu) ** 2).mean(-1, keepdims=True)
        return (v - mu) / jnp.sqrt(var + 1e-6) * g + b

    h = x * math.sqrt(H) + sinusoidal_pos_enc(T, H)[None]
    for p in params["layers"]:
        y = ln(h, p["ln1_g"], p["ln1_b"])
        q = y @ p["wq"] + p["bq"]
        k = y @ p["wk"] + p["bk"]
        v = y @ p["wv"] + p["bv"]
        q = q.reshape(B, T, n_head, d_k).transpose(0, 2, 1, 3)
        k = k.reshape(B, T, n_head, d_k).transpose(0, 2, 1, 3)
        v = v.reshape(B, T, n_head, d_k).transpose(0, 2, 1, 3)
        s = jnp.einsum("bhqd,bhkd->bhqk", q, k) / math.sqrt(d_k)
        s = jnp.where(mask[:, None, :, :] == 0, -1e9, s)
        a = jax.nn.softmax(s, axis=-1)
        ctx = jnp.einsum("bhqk,bhkd->bhqd", a, v).transpose(0, 2, 1, 3).reshape(B, T, H)
        att = ctx @ p["wo"] + p["bo"]
        x1 = h + att
        y2 = ln(x1, p["ln2_g"], p["ln2_b"])
        ffn = jnp.maximum(y2 @ p["w1"] + p["b1"], 0.0) @ p["w2"] + p["b2"]
        h = x1 + ffn
    h = ln(h, params["ln_g"], params["ln_b"])
    return h, mask


# --------------------------------------------------------------------------- #
# demo / self-test
# --------------------------------------------------------------------------- #
if __name__ == "__main__":
    B, T, H, F, n_head, n_layers = 2, 8, 32, 64, 4, 2
    key = jax.random.PRNGKey(0)

    def rnd(k, shape, s=0.1):
        return jax.random.normal(k, shape, jnp.float32) * s

    keys = jax.random.split(key, n_layers + 2)

    def make_layer(k):
        ks = jax.random.split(k, 16)
        return dict(
            ln1_g=1.0 + rnd(ks[0], (1, H)), ln1_b=rnd(ks[1], (1, H)),
            wq=rnd(ks[2], (H, H)), bq=rnd(ks[3], (1, H)),
            wk=rnd(ks[4], (H, H)), bk=rnd(ks[5], (1, H)),
            wv=rnd(ks[6], (H, H)), bv=rnd(ks[7], (1, H)),
            wo=rnd(ks[8], (H, H)), bo=rnd(ks[9], (1, H)),
            ln2_g=1.0 + rnd(ks[10], (1, H)), ln2_b=rnd(ks[11], (1, H)),
            w1=rnd(ks[12], (H, F)), b1=rnd(ks[13], (1, F)),
            w2=rnd(ks[14], (F, H)), b2=rnd(ks[15], (1, H)),
        )

    params = dict(
        layers=[make_layer(keys[i]) for i in range(n_layers)],
        ln_g=1.0 + rnd(keys[n_layers], (1, H)),
        ln_b=rnd(keys[n_layers + 1], (1, H)),
    )

    x = jax.random.normal(jax.random.PRNGKey(42), (B, T, H), jnp.float32)
    lengths = jnp.array([T, 5])
    mask = (jnp.arange(T)[None, None, :] < lengths[:, None, None]).astype(jnp.int32)

    y_ref, _ = encoder_forward_ref(x, mask, params, n_head=n_head)

    # f32 MXU-input path (safe on every generation).
    pp32 = prepare_params(params, n_head=n_head, weight_dtype=jnp.float32)
    y, m_out = encoder_forward(x, mask, pp32, n_head=n_head)
    y = jax.block_until_ready(y)
    max_diff = float(jnp.max(jnp.abs(y - y_ref)))
    assert jnp.allclose(y, y_ref, atol=2e-3, rtol=2e-3), (
        f"f32 kernel mismatch vs reference (max abs diff {max_diff})")
    assert m_out.shape == mask.shape

    # bf16 MXU-input path (all generations; v5e MXU is natively bf16): weights
    # and K/V in bf16, f32 accumulation, LayerNorm/softmax/residual math in f32.
    pp16 = prepare_params(params, n_head=n_head, weight_dtype=jnp.bfloat16)
    y16, _ = encoder_forward(x, mask, pp16, n_head=n_head)
    y16 = jax.block_until_ready(y16)
    assert float(jnp.max(jnp.abs(y16.astype(jnp.float32) - y_ref))) < 0.25, (
        "bf16 MXU path deviates too much from reference")

    print("KERNEL_OK")
</pallas_src>

<mosaic_0001>
module attributes {stable_mosaic.version = 11 : i64} {
  func.func @_kv_posenc_kernel(%arg0: i32, %arg1: i32, %arg2: memref<1x8x32xf32, #tpu.memory_space<vmem>>, %arg3: memref<8x32xf32, #tpu.memory_space<vmem>>, %arg4: memref<1x32xf32, #tpu.memory_space<vmem>>, %arg5: memref<1x32xf32, #tpu.memory_space<vmem>>, %arg6: memref<32x64xf32, #tpu.memory_space<vmem>>, %arg7: memref<1x64xf32, #tpu.memory_space<vmem>>, %arg8: memref<1x8x32xf32, #tpu.memory_space<vmem>>, %arg9: memref<1x8x32xf32, #tpu.memory_space<vmem>>) attributes {dimension_semantics = [#tpu.dimension_semantics<parallel>, #tpu.dimension_semantics<parallel>], iteration_bounds = array<i64: 2, 1>, scalar_prefetch = 0 : i64, scratch_operands = 0 : i64, tpu.core_type = #tpu.core_type<tc>, window_params = [{transform_indices = @transform_0, window_bounds = array<i64: 1, 8, 32>}, {transform_indices = @transform_1, window_bounds = array<i64: 8, 32>}, {pipeline_mode = #tpu.pipeline_mode<synchronous>, transform_indices = @transform_2, window_bounds = array<i64: 1, 32>}, {pipeline_mode = #tpu.pipeline_mode<synchronous>, transform_indices = @transform_3, window_bounds = array<i64: 1, 32>}, {pipeline_mode = #tpu.pipeline_mode<synchronous>, transform_indices = @transform_4, window_bounds = array<i64: 32, 64>}, {pipeline_mode = #tpu.pipeline_mode<synchronous>, transform_indices = @transform_5, window_bounds = array<i64: 1, 64>}, {transform_indices = @transform_6, window_bounds = array<i64: 1, 8, 32>}, {transform_indices = @transform_7, window_bounds = array<i64: 1, 8, 32>}]} {
    %c0 = arith.constant 0 : index
    %c0_0 = arith.constant 0 : index
    %c0_1 = arith.constant 0 : index
    %0 = vector.load %arg2[%c0, %c0_0, %c0_1] : memref<1x8x32xf32, #tpu.memory_space<vmem>>, vector<1x8x32xf32>
    %1 = vector.shape_cast %0 : vector<1x8x32xf32> to vector<8x32xf32>
    %cst = arith.constant 5.65685415 : f32
    %2 = vector.broadcast %cst : f32 to vector<8x32xf32>
    %3 = arith.mulf %1, %2 : vector<8x32xf32>
    %c0_2 = arith.constant 0 : index
    %c0_3 = arith.constant 0 : index
    %4 = vector.load %arg3[%c0_2, %c0_3] : memref<8x32xf32, #tpu.memory_space<vmem>>, vector<8x32xf32>
    %5 = arith.addf %3, %4 : vector<8x32xf32>
    %c0_4 = arith.constant 0 : index
    %c0_5 = arith.constant 0 : index
    %6 = vector.load %arg4[%c0_4, %c0_5] : memref<1x32xf32, #tpu.memory_space<vmem>>, vector<1x32xf32>
    %c0_6 = arith.constant 0 : index
    %c0_7 = arith.constant 0 : index
    %7 = vector.load %arg5[%c0_6, %c0_7] : memref<1x32xf32, #tpu.memory_space<vmem>>, vector<1x32xf32>
    %c0_8 = arith.constant 0 : index
    %c0_9 = arith.constant 0 : index
    %8 = vector.load %arg6[%c0_8, %c0_9] : memref<32x64xf32, #tpu.memory_space<vmem>>, vector<32x64xf32>
    %c0_10 = arith.constant 0 : index
    %c0_11 = arith.constant 0 : index
    %9 = vector.load %arg7[%c0_10, %c0_11] : memref<1x64xf32, #tpu.memory_space<vmem>>, vector<1x64xf32>
    %cst_12 = arith.constant dense<0.000000e+00> : vector<8xf32>
    %10 = vector.multi_reduction <add>, %5, %cst_12 [1] : vector<8x32xf32> to vector<8xf32>
    %11 = vector.shape_cast %10 : vector<8xf32> to vector<8x1xf32>
    %cst_13 = arith.constant 3.200000e+01 : f32
    %12 = vector.broadcast %cst_13 : f32 to vector<8x1xf32>
    %13 = arith.divf %11, %12 : vector<8x1xf32>
    %14 = vector.broadcast %13 : vector<8x1xf32> to vector<8x32xf32>
    %15 = arith.subf %5, %14 : vector<8x32xf32>
    %16 = arith.mulf %15, %15 : vector<8x32xf32>
    %cst_14 = arith.constant dense<0.000000e+00> : vector<8xf32>
    %17 = vector.multi_reduction <add>, %16, %cst_14 [1] : vector<8x32xf32> to vector<8xf32>
    %18 = vector.shape_cast %17 : vector<8xf32> to vector<8x1xf32>
    %cst_15 = arith.constant 3.200000e+01 : f32
    %19 = vector.broadcast %cst_15 : f32 to vector<8x1xf32>
    %20 = arith.divf %18, %19 : vector<8x1xf32>
    %21 = vector.broadcast %13 : vector<8x1xf32> to vector<8x32xf32>
    %22 = arith.subf %5, %21 : vector<8x32xf32>
    %cst_16 = arith.constant 9.99999997E-7 : f32
    %23 = vector.broadcast %cst_16 : f32 to vector<8x1xf32>
    %24 = arith.addf %20, %23 : vector<8x1xf32>
    %25 = math.rsqrt %24 : vector<8x1xf32>
    %26 = vector.broadcast %25 : vector<8x1xf32> to vector<8x32xf32>
    %27 = arith.mulf %22, %26 : vector<8x32xf32>
    %28 = vector.broadcast %6 : vector<1x32xf32> to vector<8x32xf32>
    %29 = arith.mulf %27, %28 : vector<8x32xf32>
    %30 = vector.broadcast %7 : vector<1x32xf32> to vector<8x32xf32>
    %31 = arith.addf %29, %30 : vector<8x32xf32>
    %cst_17 = arith.constant dense<0.000000e+00> : vector<8x64xf32>
    %32 = tpu.matmul %31, %8, %cst_17 {dimension_numbers = #tpu.dot_dimension_numbers<[1], [0], [0], [1], [0, 0, 1, 1], [], []>} : vector<8x32xf32>, vector<32x64xf32>, vector<8x64xf32> -> vector<8x64xf32>
    %33 = vector.broadcast %9 : vector<1x64xf32> to vector<8x64xf32>
    %34 = arith.addf %32, %33 : vector<8x64xf32>
    %35 = vector.extract_strided_slice %34 {offsets = [0, 0], sizes = [8, 32], strides = [1, 1]} : vector<8x64xf32> to vector<8x32xf32>
    %c0_18 = arith.constant 0 : index
    %c0_19 = arith.constant 0 : index
    %c0_20 = arith.constant 0 : index
    %36 = vector.load %arg8[%c0_18, %c0_19, %c0_20] : memref<1x8x32xf32, #tpu.memory_space<vmem>>, vector<1x8x32xf32>
    %37 = vector.shape_cast %36 : vector<1x8x32xf32> to vector<8x32xf32>
    %38 = vector.shape_cast %35 : vector<8x32xf32> to vector<1x8x32xf32>
    tpu.vector_store %arg8[%c0_18, %c0_19, %c0_20], %38 {strides = array<i32>} : memref<1x8x32xf32, #tpu.memory_space<vmem>>, vector<1x8x32xf32>,
    %39 = vector.extract_strided_slice %34 {offsets = [0, 32], sizes = [8, 32], strides = [1, 1]} : vector<8x64xf32> to vector<8x32xf32>
    %c0_21 = arith.constant 0 : index
    %c0_22 = arith.constant 0 : index
    %c0_23 = arith.constant 0 : index
    %40 = vector.load %arg9[%c0_21, %c0_22, %c0_23] : memref<1x8x32xf32, #tpu.memory_space<vmem>>, vector<1x8x32xf32>
    %41 = vector.shape_cast %40 : vector<1x8x32xf32> to vector<8x32xf32>
    %42 = vector.shape_cast %39 : vector<8x32xf32> to vector<1x8x32xf32>
    tpu.vector_store %arg9[%c0_21, %c0_22, %c0_23], %42 {strides = array<i32>} : memref<1x8x32xf32, #tpu.memory_space<vmem>>, vector<1x8x32xf32>,
    return
  }
  func.func @transform_0(%arg0: i32, %arg1: i32) -> (i32, i32, i32) {
    %c0_i32 = arith.constant 0 : i32
    %c0_i32_0 = arith.constant 0 : i32
    return %arg0, %arg1, %c0_i32 : i32, i32, i32
  }
  func.func @transform_1(%arg0: i32, %arg1: i32) -> (i32, i32) {
    %c0_i32 = arith.constant 0 : i32
    %c0_i32_0 = arith.constant 0 : i32
    return %arg1, %c0_i32 : i32, i32
  }
  func.func @transform_2(%arg0: i32, %arg1: i32) -> (i32, i32) {
    %c0_i32 = arith.constant 0 : i32
    %c0_i32_0 = arith.constant 0 : i32
    %c0_i32_1 = arith.constant 0 : i32
    return %c0_i32, %c0_i32_0 : i32, i32
  }
  func.func @transform_3(%arg0: i32, %arg1: i32) -> (i32, i32) {
    %c0_i32 = arith.constant 0 : i32
    %c0_i32_0 = arith.constant 0 : i32
    %c0_i32_1 = arith.constant 0 : i32
    return %c0_i32, %c0_i32_0 : i32, i32
  }
  func.func @transform_4(%arg0: i32, %arg1: i32) -> (i32, i32) {
    %c0_i32 = arith.constant 0 : i32
    %c0_i32_0 = arith.constant 0 : i32
    %c0_i32_1 = arith.constant 0 : i32
    return %c0_i32, %c0_i32_0 : i32, i32
  }
  func.func @transform_5(%arg0: i32, %arg1: i32) -> (i32, i32) {
    %c0_i32 = arith.constant 0 : i32
    %c0_i32_0 = arith.constant 0 : i32
    %c0_i32_1 = arith.constant 0 : i32
    return %c0_i32, %c0_i32_0 : i32, i32
  }
  func.func @transform_6(%arg0: i32, %arg1: i32) -> (i32, i32, i32) {
    %c0_i32 = arith.constant 0 : i32
    %c0_i32_0 = arith.constant 0 : i32
    return %arg0, %arg1, %c0_i32 : i32, i32, i32
  }
  func.func @transform_7(%arg0: i32, %arg1: i32) -> (i32, i32, i32) {
    %c0_i32 = arith.constant 0 : i32
    %c0_i32_0 = arith.constant 0 : i32
    return %arg0, %arg1, %c0_i32 : i32, i32, i32
  }
}

</mosaic_0001>

<llo_original>
// kernel: tpu_custom_call.1
$region0: #{tpu_custom_call.1}
  #allocation0 [shape = 'u32[]', space=smem, size = 0x4, offset = 0x4, fixed_abs, tag = 'smem constant byte address 0x4 - core index']
  #allocation1 [shape = 'u32[144,128]{1,0:T(1,128)}', space=vmem, size = 0x12000, scoped, tag = 'internal scratch']
  %s0 = inlined_call_operand.hbm [shape: f32[2,8,32], index: 0, kind: input, shape index: {}]
  %s1 = inlined_call_operand.hbm [shape: f32[8,32], index: 1, kind: input, shape index: {}]
  %s2 = inlined_call_operand.vmem [shape: f32[1,32], index: 2, kind: input, shape index: {}]
  %s3 = inlined_call_operand.vmem [shape: f32[1,32], index: 3, kind: input, shape index: {}]
  %s4 = inlined_call_operand.hbm [shape: f32[32,64], index: 4, kind: input, shape index: {}]
  %s5 = inlined_call_operand.vmem [shape: f32[1,64], index: 5, kind: input, shape index: {}]
  %s6 = inlined_call_operand.hbm [shape: f32[2,8,32], index: 6, kind: output, shape index: {0}]
  %s7 = inlined_call_operand.hbm [shape: f32[2,8,32], index: 7, kind: output, shape index: {1}]
  %8 = xla_tuple %s6, %s7
  %s9 = sld [smem:[#allocation0]]
  $region77: #{tpu_custom_call.1} parent=0
    _
  %s11 = ssub.s32 1, %s9
  %s12 = scalar_select 0, %s11, %s9
  $region1: #{tpu_custom_call.1} parent=0
    #allocation2 [shape = 'u8[8192]{0}', space=vmem, size = 0x2000, scoped, tag = 'input window, operand 0']
    #allocation3 [shape = 's32[2]{0}', space=sflag, size = 0x8, scoped, tag = 'scoped memory for tpu_custom_call.1']
    #allocation4 [shape = 's32[2]{0}', space=sflag, size = 0x8, scoped, tag = 'scoped memory for tpu_custom_call.1']
    #allocation5 [shape = 'u8[4096]{0}', space=vmem, size = 0x1000, scoped, tag = 'input window, operand 1, single buffered']
    #allocation6 [shape = 's32[1]{0}', space=sflag, size = 0x4, scoped, tag = 'scoped memory for tpu_custom_call.1']
    #allocation7 [shape = 'u8[16384]{0}', space=vmem, size = 0x4000, scoped, tag = 'input window, operand 4, single buffered']
    #allocation8 [shape = 'u8[8192]{0}', space=vmem, size = 0x2000, scoped, tag = 'output window, operand 0']
    #allocation9 [shape = 'u8[8192]{0}', space=vmem, size = 0x2000, scoped, tag = 'output window, operand 1']
    #allocation10 [shape = 's32[2]{0}', space=sflag, size = 0x8, scoped, tag = 'scoped memory for tpu_custom_call.1']
    %13 = vsyncpa [#allocation3], 0
    %s14 = scalar_lea.sflag [#allocation3], 1
    %15 = vsyncpa %s14, 0
    %16 = vsyncpa [#allocation6], 0
    %17 = vsyncpa [#allocation4], 0
    %s18 = scalar_lea.sflag [#allocation4], 1
    %19 = vsyncpa %s18, 0
    %20 = vsyncpa [#allocation10], 0
    %s21 = scalar_lea.sflag [#allocation10], 1
    %22 = vsyncpa %s21, 0
    loop: start=0, step=1, limit=4
    $region2: #{tpu_custom_call.1} parent=1 // loop_pre_header
      _
    $region3: #{tpu_custom_call.1} parent=1 // loop_header
      %s24 = sphi 0, %s28
      %p25 = scmp.ge.s32.totalorder %s24, 4
      %s31 = sphi 0, %s43
      %s32 = sphi 0, %s39
      %s33 = sphi 0, %s31
      %s34 = sphi 0, %s32
      %s35 = sphi 0, %s33
      %s36 = sphi 0, %s34
      %s48 = sphi 0, %s50
      %s51 = sphi 0, %s48
      %s52 = sphi 0, %s51
      %s68 = sphi 0, %s52
      %s74 = sphi 0, %s76
      %s77 = sphi 0, %s74
      %s78 = sphi 0, %s77
      %s94 = sphi 0, %s78
      %s98 = sphi 0, %s98
      %s100 = sphi 0, %s98
      %s101 = sphi 0, %s100
      %s115 = sphi 0, %s101
      %s119 = sphi 0, %s119
      %s121 = sphi 0, %s119
      %s122 = sphi 0, %s121
      %s136 = sphi 0, %s122
      %s140 = sphi 0, %s140
      %s142 = sphi 0, %s140
      %s143 = sphi 0, %s142
      %s157 = sphi 0, %s143
      %s161 = sphi 0, %s161
      %s163 = sphi 0, %s161
      %s164 = sphi 0, %s163
      %s178 = sphi 0, %s164
      %s186 = sphi 0, %s188
      %s189 = sphi 0, %s186
      %s190 = sphi 0, %s189
      %s206 = sphi 0, %s190
      %s214 = sphi 0, %s216
      %s217 = sphi 0, %s214
      %s218 = sphi 0, %s217
      %s234 = sphi 0, %s218
    $region4: #{tpu_custom_call.1} parent=1 // loop_header_branch
      %27 = sbr.rel (%p25) target = $region8
    $region5: #{tpu_custom_call.1} parent=1 // loop_body
      %s29 = ssub.s32 %s24, 1
      %s30 = ssub.s32 %s24, 2
      %s37 = sadd.s32 1, %s32
      %p38 = scmp.ge.s32.totalorder %s37, 1
      %s39 = scalar_select %p38, 0, %s37
      %s40 = sadd.s32 1, %s31
      %s41 = scalar_select %p38, %s40, %s31
      %p42 = scmp.ge.s32.totalorder %s41, 2
      %s43 = scalar_select %p42, 0, %s41
      %s44 = ssub.s32 %s31, %s43
      %s45 = ssub.s32 %s32, %s39
      %s46 = sor.u32 %s44, %s45
      %p47 = scmp.eq.s32.totalorder %s46, 0
      %s49 = sadd.s32 %s48, 1
      %s50 = scalar_select %p47, %s48, %s49
      %p53 = pneg %p47
      %p54 = scmp.eq.s32.totalorder %s24, 1
      %p55 = por %p53, %p54
      %p56 = scmp.ne.s32.totalorder %s48, %s51
      %p57 = scmp.eq.s32.totalorder %s24, 0
      %p58 = por %p56, %p57
      %p59 = scmp.ne.s32.totalorder %s48, %s51
      %p60 = scmp.eq.s32.totalorder %s29, 1
      %p61 = por %p59, %p60
      %p62 = scmp.ne.s32.totalorder %s51, %s52
      %p63 = scmp.eq.s32.totalorder %s29, 0
      %p64 = por %p62, %p63
      %p65 = scmp.ne.s32.totalorder %s51, %s52
      %p66 = scmp.eq.s32.totalorder %s30, 1
      %p67 = por %p65, %p66
      %p69 = scmp.ne.s32.totalorder %s52, %s68
      %p70 = scmp.eq.s32.totalorder %s30, 0
      %p71 = por %p69, %p70
      %s72 = ssub.s32 %s32, %s39
      %p73 = scmp.eq.s32.totalorder %s72, 0
      %s75 = sadd.s32 %s74, 1
      %s76 = scalar_select %p73, %s74, %s75
      %p79 = pneg %p73
      %p80 = scmp.eq.s32.totalorder %s24, 1
      %p81 = por %p79, %p80
      %p82 = scmp.ne.s32.totalorder %s74, %s77
      %p83 = scmp.eq.s32.totalorder %s24, 0
      %p84 = por %p82, %p83
      %p85 = scmp.ne.s32.totalorder %s74, %s77
      %p86 = scmp.eq.s32.totalorder %s29, 1
      %p87 = por %p85, %p86
      %p88 = scmp.ne.s32.totalorder %s77, %s78
      %p89 = scmp.eq.s32.totalorder %s29, 0
      %p90 = por %p88, %p89
      %p91 = scmp.ne.s32.totalorder %s77, %s78
      %p92 = scmp.eq.s32.totalorder %s30, 1
      %p93 = por %p91, %p92
      %p95 = scmp.ne.s32.totalorder %s78, %s94
      %p96 = scmp.eq.s32.totalorder %s30, 0
      %p97 = por %p95, %p96
      %s99 = sadd.s32 %s98, 1
      %p102 = scmp.eq.s32.totalorder %s24, 1
      %p103 = scmp.ne.s32.totalorder %s98, %s100
      %p104 = scmp.eq.s32.totalorder %s24, 0
      %p105 = por %p103, %p104
      %p106 = scmp.ne.s32.totalorder %s98, %s100
      %p107 = scmp.eq.s32.totalorder %s29, 1
      %p108 = por %p106, %p107
      %p109 = scmp.ne.s32.totalorder %s100, %s101
      %p110 = scmp.eq.s32.totalorder %s29, 0
      %p111 = por %p109, %p110
      %p112 = scmp.ne.s32.totalorder %s100, %s101
      %p113 = scmp.eq.s32.totalorder %s30, 1
      %p114 = por %p112, %p113
      %p116 = scmp.ne.s32.totalorder %s101, %s115
      %p117 = scmp.eq.s32.totalorder %s30, 0
      %p118 = por %p116, %p117
      %s120 = sadd.s32 %s119, 1
      %p123 = scmp.eq.s32.totalorder %s24, 1
      %p124 = scmp.ne.s32.totalorder %s119, %s121
      %p125 = scmp.eq.s32.totalorder %s24, 0
      %p126 = por %p124, %p125
      %p127 = scmp.ne.s32.totalorder %s119, %s121
      %p128 = scmp.eq.s32.totalorder %s29, 1
      %p129 = por %p127, %p128
      %p130 = scmp.ne.s32.totalorder %s121, %s122
      %p131 = scmp.eq.s32.totalorder %s29, 0
      %p132 = por %p130, %p131
      %p133 = scmp.ne.s32.totalorder %s121, %s122
      %p134 = scmp.eq.s32.totalorder %s30, 1
      %p135 = por %p133, %p134
      %p137 = scmp.ne.s32.totalorder %s122, %s136
      %p138 = scmp.eq.s32.totalorder %s30, 0
      %p139 = por %p137, %p138
      %s141 = sadd.s32 %s140, 1
      %p144 = scmp.eq.s32.totalorder %s24, 1
      %p145 = scmp.ne.s32.totalorder %s140, %s142
      %p146 = scmp.eq.s32.totalorder %s24, 0
      %p147 = por %p145, %p146
      %p148 = scmp.ne.s32.totalorder %s140, %s142
      %p149 = scmp.eq.s32.totalorder %s29, 1
      %p150 = por %p148, %p149
      %p151 = scmp.ne.s32.totalorder %s142, %s143
      %p152 = scmp.eq.s32.totalorder %s29, 0
      %p153 = por %p151, %p152
      %p154 = scmp.ne.s32.totalorder %s142, %s143
      %p155 = scmp.eq.s32.totalorder %s30, 1
      %p156 = por %p154, %p155
      %p158 = scmp.ne.s32.totalorder %s143, %s157
      %p159 = scmp.eq.s32.totalorder %s30, 0
      %p160 = por %p158, %p159
      %s162 = sadd.s32 %s161, 1
      %p165 = scmp.eq.s32.totalorder %s24, 1
      %p166 = scmp.ne.s32.totalorder %s161, %s163
      %p167 = scmp.eq.s32.totalorder %s24, 0
      %p168 = por %p166, %p167
      %p169 = scmp.ne.s32.totalorder %s161, %s163
      %p170 = scmp.eq.s32.totalorder %s29, 1
      %p171 = por %p169, %p170
      %p172 = scmp.ne.s32.totalorder %s163, %s164
      %p173 = scmp.eq.s32.totalorder %s29, 0
      %p174 = por %p172, %p173
      %p175 = scmp.ne.s32.totalorder %s163, %s164
      %p176 = scmp.eq.s32.totalorder %s30, 1
      %p177 = por %p175, %p176
      %p179 = scmp.ne.s32.totalorder %s164, %s178
      %p180 = scmp.eq.s32.totalorder %s30, 0
      %p181 = por %p179, %p180
      %s182 = ssub.s32 %s31, %s43
      %s183 = ssub.s32 %s32, %s39
      %s184 = sor.u32 %s182, %s183
      %p185 = scmp.eq.s32.totalorder %s184, 0
      %s187 = sadd.s32 %s186, 1
      %s188 = scalar_select %p185, %s186, %s187
      %p191 = pneg %p185
      %p192 = scmp.eq.s32.totalorder %s24, 1
      %p193 = por %p191, %p192
      %p194 = scmp.ne.s32.totalorder %s186, %s189
      %p195 = scmp.eq.s32.totalorder %s24, 0
      %p196 = por %p194, %p195
      %p197 = scmp.ne.s32.totalorder %s186, %s189
      %p198 = scmp.eq.s32.totalorder %s29, 1
      %p199 = por %p197, %p198
      %p200 = scmp.ne.s32.totalorder %s189, %s190
      %p201 = scmp.eq.s32.totalorder %s29, 0
      %p202 = por %p200, %p201
      %p203 = scmp.ne.s32.totalorder %s189, %s190
      %p204 = scmp.eq.s32.totalorder %s30, 1
      %p205 = por %p203, %p204
      %p207 = scmp.ne.s32.totalorder %s190, %s206
      %p208 = scmp.eq.s32.totalorder %s30, 0
      %p209 = por %p207, %p208
      %s210 = ssub.s32 %s31, %s43
      %s211 = ssub.s32 %s32, %s39
      %s212 = sor.u32 %s210, %s211
      %p213 = scmp.eq.s32.totalorder %s212, 0
      %s215 = sadd.s32 %s214, 1
      %s216 = scalar_select %p213, %s214, %s215
      %p219 = pneg %p213
      %p220 = scmp.eq.s32.totalorder %s24, 1
      %p221 = por %p219, %p220
      %p222 = scmp.ne.s32.totalorder %s214, %s217
      %p223 = scmp.eq.s32.totalorder %s24, 0
      %p224 = por %p222, %p223
      %p225 = scmp.ne.s32.totalorder %s214, %s217
      %p226 = scmp.eq.s32.totalorder %s29, 1
      %p227 = por %p225, %p226
      %p228 = scmp.ne.s32.totalorder %s217, %s218
      %p229 = scmp.eq.s32.totalorder %s29, 0
      %p230 = por %p228, %p229
      %p231 = scmp.ne.s32.totalorder %s217, %s218
      %p232 = scmp.eq.s32.totalorder %s30, 1
      %p233 = por %p231, %p232
      %p235 = scmp.ne.s32.totalorder %s218, %s234
      %p236 = scmp.eq.s32.totalorder %s30, 0
      %p237 = por %p235, %p236
      %p238 = scmp.le.s32.totalorder 1, %s24
      %p239 = scmp.lt.s32.totalorder %s24, 3
      %p240 = pnand %p238, %p239
      %p241 = pneg %p240
      // Predicated region
      $region9: #{tpu_custom_call.1} parent=5 // pred_check
        _
      $region10: #{tpu_custom_call.1} parent=5 // pred_check_branch
        %243 = sbr.rel (%p240) target = $region12
      $region11: #{tpu_custom_call.1} parent=5 // pred_region
        %s244 = ssub.s32 %s24, 1
        // Predicated region
        $region13: #{tpu_custom_call.1} parent=11 // pred_check
          %p245 = pneg %p90
        $region14: #{tpu_custom_call.1} parent=11 // pred_check_branch
          %247 = sbr.rel (%p245) target = $region16
        $region15: #{tpu_custom_call.1} parent=11 // pred_region
          %s249 = ssub.s32 128, 128
          %250 = vsyncadd [#allocation6], %s249
          %s251 = smul.addr %s34, 128
          %s252 = scalar_lea.hbm %s1, %s251
          %s254 = sshll.u32 [#allocation5], 4
          %s255 = int_to_ptr.vmem [resolvable:$true] %s254
          %257 = dma.hbm_to_vmem [thread:$0]  %s252, 128, %s255, [#allocation6]
        $region16: #{tpu_custom_call.1} parent=11 // pred_fallthru
          _
        // Predicated region
        $region17: #{tpu_custom_call.1} parent=11 // pred_check
          %p258 = pneg %p111
        $region18: #{tpu_custom_call.1} parent=11 // pred_check_branch
          %260 = sbr.rel (%p258) target = $region20
        $region19: #{tpu_custom_call.1} parent=11 // pred_region
          _
        $region20: #{tpu_custom_call.1} parent=11 // pred_fallthru
          _
        // Predicated region
        $region21: #{tpu_custom_call.1} parent=11 // pred_check
          %p261 = pneg %p132
        $region22: #{tpu_custom_call.1} parent=11 // pred_check_branch
          %263 = sbr.rel (%p261) target = $region24
        $region23: #{tpu_custom_call.1} parent=11 // pred_region
          _
        $region24: #{tpu_custom_call.1} parent=11 // pred_fallthru
          _
        // Predicated region
        $region25: #{tpu_custom_call.1} parent=11 // pred_check
          %p264 = pneg %p153
        $region26: #{tpu_custom_call.1} parent=11 // pred_check_branch
          %266 = sbr.rel (%p264) target = $region28
        $region27: #{tpu_custom_call.1} parent=11 // pred_region
          %s268 = ssub.s32 512, 512
          %269 = vsyncadd [#allocation6], %s268
          %s270 = sshll.u32 [#allocation7], 4
          %s271 = int_to_ptr.vmem [resolvable:$true] %s270
          %276 = dma.hbm_to_vmem [thread:$0]  %s4, 512, %s271, [#allocation6], 128, 128, 8
        $region28: #{tpu_custom_call.1} parent=11 // pred_fallthru
          _
        // Predicated region
        $region29: #{tpu_custom_call.1} parent=11 // pred_check
          %p277 = pneg %p174
        $region30: #{tpu_custom_call.1} parent=11 // pred_check_branch
          %279 = sbr.rel (%p277) target = $region32
        $region31: #{tpu_custom_call.1} parent=11 // pred_region
          _
        $region32: #{tpu_custom_call.1} parent=11 // pred_fallthru
          _
      $region12: #{tpu_custom_call.1} parent=5 // pred_fallthru
        _
      %p280 = scmp.lt.s32.totalorder %s24, 2
      // Predicated region
      $region33: #{tpu_custom_call.1} parent=5 // pred_check
        %p281 = pneg %p280
      $region34: #{tpu_custom_call.1} parent=5 // pred_check_branch
        %283 = sbr.rel (%p281) target = $region36
      $region35: #{tpu_custom_call.1} parent=5 // pred_region
        // Predicated region
        $region37: #{tpu_custom_call.1} parent=35 // pred_check
          %p284 = pneg %p58
        $region38: #{tpu_custom_call.1} parent=35 // pred_check_branch
          %286 = sbr.rel (%p284) target = $region40
        $region39: #{tpu_custom_call.1} parent=35 // pred_region
          %s287 = sand.u32 %s48, 1
          %s288 = scalar_lea.sflag [#allocation3], %s287
          %s289 = sand.u32 %s48, 1
          %s290 = smul.addr %s289, 8
          %s291 = scalar_lea.vmem [#allocation2], %s290
          %s293 = ssub.s32 128, 128
          %294 = vsyncadd %s288, %s293
          %s295 = sadd.s32 %s32, %s31
          %s296 = smul.addr %s295, 128
          %s297 = scalar_lea.hbm %s0, %s296
          %s299 = sshll.u32 %s291, 4
          %s300 = int_to_ptr.vmem [resolvable:$true] %s299
          %302 = dma.hbm_to_vmem [thread:$0]  %s297, 128, %s300, %s288
        $region40: #{tpu_custom_call.1} parent=35 // pred_fallthru
          _
      $region36: #{tpu_custom_call.1} parent=5 // pred_fallthru
        _
      %p303 = scmp.le.s32.totalorder 1, %s24
      %p304 = scmp.lt.s32.totalorder %s24, 3
      %p305 = pnand %p303, %p304
      %p306 = pneg %p305
      // Predicated region
      $region41: #{tpu_custom_call.1} parent=5 // pred_check
        _
      $region42: #{tpu_custom_call.1} parent=5 // pred_check_branch
        %308 = sbr.rel (%p305) target = $region44
      $region43: #{tpu_custom_call.1} parent=5 // pred_region
        %s309 = ssub.s32 %s24, 1
        %s310 = sand.u32 %s51, 1
        %s311 = scalar_lea.sflag [#allocation3], %s310
        %s312 = sand.u32 %s51, 1
        %s313 = smul.addr %s312, 8
        %s314 = scalar_lea.vmem [#allocation2], %s313
        // Predicated region
        $region45: #{tpu_custom_call.1} parent=43 // pred_check
          %p315 = pneg %p64
        $region46: #{tpu_custom_call.1} parent=43 // pred_check_branch
          %317 = sbr.rel (%p315) target = $region48
        $region47: #{tpu_custom_call.1} parent=43 // pred_region
          %318 = dma.done %s311, 128
        $region48: #{tpu_custom_call.1} parent=43 // pred_fallthru
          _
        // Predicated region
        $region49: #{tpu_custom_call.1} parent=43 // pred_check
          %p319 = pneg %p90
        $region50: #{tpu_custom_call.1} parent=43 // pred_check_branch
          %321 = sbr.rel (%p319) target = $region52
        $region51: #{tpu_custom_call.1} parent=43 // pred_region
          %322 = dma.done [#allocation6], 128
        $region52: #{tpu_custom_call.1} parent=43 // pred_fallthru
          _
        // Predicated region
        $region53: #{tpu_custom_call.1} parent=43 // pred_check
          %p323 = pneg %p153
        $region54: #{tpu_custom_call.1} parent=43 // pred_check_branch
          %325 = sbr.rel (%p323) target = $region56
        $region55: #{tpu_custom_call.1} parent=43 // pred_region
          %326 = dma.done [#allocation6], 512
        $region56: #{tpu_custom_call.1} parent=43 // pred_fallthru
          _
        %s327 = sand.u32 %s51, 1
        %s328 = scalar_lea.sflag [#allocation3], %s327
        %s329 = sand.u32 %s51, 1
        %s330 = smul.addr %s329, 8
        %s331 = scalar_lea.vmem [#allocation2], %s330
        %p332 = pneg %p64
        %p333 = pneg %p61
        %p334 = pneg %p90
        %p335 = pneg %p87
        %p336 = pneg %p111
        %p337 = pneg %p108
        %p338 = pneg %p132
        %p339 = pneg %p129
        %p340 = pneg %p153
        %p341 = pneg %p150
        %p342 = pneg %p174
        %p343 = pneg %p171
        %p344 = pneg %p202
        %p345 = pneg %p199
        %s346 = sand.u32 %s189, 1
        %s347 = scalar_lea.sflag [#allocation4], %s346
        %s348 = sand.u32 %s189, 1
        %s349 = smul.addr %s348, 8
        %s350 = scalar_lea.vmem [#allocation8], %s349
        %p351 = pneg %p230
        %p352 = pneg %p227
        %s353 = sand.u32 %s217, 1
        %s354 = scalar_lea.sflag [#allocation10], %s353
        %s355 = sand.u32 %s217, 1
        %s356 = smul.addr %s355, 8
        %s357 = scalar_lea.vmem [#allocation9], %s356
        %v358 = vld [vmem:[%s314] sm:$0xff]
        %v359 = vmul.f32 %v358, 5.656854
        %v360 = vld [vmem:[#allocation5] sm:$0xff]
        %v361 = vadd.f32 %v359, %v360
        %v362 = vld [vmem:[%s2] sm:$0x1]
        %v363 = vld [vmem:[%s3] sm:$0x1]
        %v364 = vld [vmem:[#allocation7] sm:$0xff]
        %v365 = vld [vmem:[#allocation7 + $0x8] sm:$0xff]
        %v366 = vld [vmem:[#allocation7 + $0x10] sm:$0xff]
        %v367 = vld [vmem:[#allocation7 + $0x18] sm:$0xff]
        %v368 = vld [vmem:[%s5] sm:$0x1]
        %vm369 = vcmask 261120
        %v370 = vsel %vm369, %v361, 0.0
        %371 = vadd.xlane.f32.xlu0 %v370
        %v372 = vpop.xlane.xlu0 %371
        %v373 = vrcp.pop 32.0
        %v374 = vmul.f32 %v372, %v373
        %v375 = vsub.f32 %v361, %v374
        %v376 = vmul.f32 %v375, %v375
        %v377 = vsel %vm369, %v376, 0.0
        %378 = vadd.xlane.f32.xlu0 %v377
        %v379 = vpop.xlane.xlu0 %378
        %v380 = vmul.f32 %v379, %v373
        %v381 = vadd.f32 %v380, 1e-06
        %v382 = vrsqrt.pop %v381
        %v383 = vmul.f32 %v375, %v382
        %v385 = vlaneseq
        %v386 = vshrl.u32 %v385, 7
        %v387 = vsub.s32 0, %v386
        %v388 = vrot.slane %v362, %v387
        %v390 = vmul.f32 %v383, %v388
        %v392 = vlaneseq
        %v393 = vshrl.u32 %v392, 7
        %v394 = vsub.s32 0, %v393
        %v395 = vrot.slane %v363, %v394
        %v397 = vadd.f32 %v390, %v395
        %v399 = vlaneseq
        %v400 = vshrl.u32 %v399, 7
        %v401 = vsub.s32 0, %v400
        %v402 = vrot.slane %v368, %v401
        %v405 = vsel %vm369, %v397, 0
        %407 = vmatprep.subr.mxu0 0.0
        %408 = vmatpush1.msra.mxu0 %v364
        %409 = vmatprep.subr.mxu0 0.0
        %410 = vmatpush1.msra.mxu0 %v365
        %411 = vmatprep.subr.mxu0 0.0
        %412 = vmatpush1.msra.mxu0 %v366
        %413 = vmatprep.subr.mxu0 0.0
        %414 = vmatpush1.msra.mxu0 %v367
        %415 = vmatprep.subr.mxu0 0.0
        %416 = vmatpush1.msra.mxu0 0.0
        %417 = vmatprep.subr.mxu0 0.0
        %418 = vmatpush1.msra.mxu0 0.0
        %419 = vmatprep.subr.mxu0 0.0
        %420 = vmatpush1.msra.mxu0 0.0
        %421 = vmatprep.subr.mxu0 0.0
        %422 = vmatpush1.msra.mxu0 0.0
        %423 = vmatprep.subr.mxu0 0.0
        %424 = vmatpush1.msra.mxu0 0.0
        %425 = vmatprep.subr.mxu0 0.0
        %426 = vmatpush1.msra.mxu0 0.0
        %427 = vmatprep.subr.mxu0 0.0
        %428 = vmatpush1.msra.mxu0 0.0
        %429 = vmatprep.subr.mxu0 0.0
        %430 = vmatpush1.msra.mxu0 0.0
        %431 = vmatprep.subr.mxu0 0.0
        %432 = vmatpush1.msra.mxu0 0.0
        %433 = vmatprep.subr.mxu0 0.0
        %434 = vmatpush1.msra.mxu0 0.0
        %435 = vmatprep.subr.mxu0 0.0
        %436 = vmatpush1.msra.mxu0 0.0
        %437 = vmatprep.subr.mxu0 0.0
        %438 = vmatpush1.msra.mxu0 0.0
        %439 = vmatprep.subr.mxu0 0.0
        %440 = vmatpush1.msra.mxu0 0.0
        %441 = vmatprep.subr.mxu0 0.0
        %442 = vmatpush1.msra.mxu0 0.0
        %443 = vmatprep.subr.mxu0 0.0
        %444 = vmatpush1.msra.mxu0 0.0
        %445 = vmatprep.subr.mxu0 0.0
        %446 = vmatpush1.msra.mxu0 0.0
        %447 = vmatprep.subr.mxu0 0.0
        %448 = vmatpush1.msra.mxu0 0.0
        %449 = vmatprep.subr.mxu0 0.0
        %450 = vmatpush1.msra.mxu0 0.0
        %451 = vmatprep.subr.mxu0 0.0
        %452 = vmatpush1.msra.mxu0 0.0
        %453 = vmatprep.subr.mxu0 0.0
        %454 = vmatpush1.msra.mxu0 0.0
        %455 = vmatprep.subr.mxu0 0.0
        %456 = vmatpush1.msra.mxu0 0.0
        %457 = vmatprep.subr.mxu0 0.0
        %458 = vmatpush1.msra.mxu0 0.0
        %459 = vmatprep.subr.mxu0 0.0
        %460 = vmatpush1.msra.mxu0 0.0
        %461 = vmatprep.subr.mxu0 0.0
        %462 = vmatpush1.msra.mxu0 0.0
        %463 = vmatprep.subr.mxu0 0.0
        %464 = vmatpush1.msra.mxu0 0.0
        %465 = vmatprep.subr.mxu0 0.0
        %466 = vmatpush1.msra.mxu0 0.0
        %467 = vmatprep.subr.mxu0 0.0
        %468 = vmatpush1.msra.mxu0 0.0
        %469 = vmatprep.subr.mxu0 0.0
        %470 = vmatpush1.msra.mxu0 0.0
        %471 = vmatprep.mubr.f32.mxu0 0.0
        %472 = vmatmul.mubr.f32.gmra.mrb[0].mxu0 %v405
        %v473 = vpop.f32.mrb[0].mxu0
        %v474 = vadd.f32 %v402, %v473
        %v475 = vpop.f32.mrb[0].mxu0
        %476 = vdwg.mxu0
        %477 = vst.msk [vmem:[%s350] sm:$0xff] %vm369, %v474
        %479 = vrot.lane.b32.xlu0 %v474, 96
        %v480 = vpop.permute.xlu0 %479
        %482 = vst.msk [vmem:[%s357] sm:$0xff] %vm369, %v480
        %s483 = sand.u32 %s189, 1
        %s484 = scalar_lea.sflag [#allocation4], %s483
        %s485 = sand.u32 %s189, 1
        %s486 = smul.addr %s485, 8
        %s487 = scalar_lea.vmem [#allocation8], %s486
        %s488 = sand.u32 %s217, 1
        %s489 = scalar_lea.sflag [#allocation10], %s488
        %s490 = sand.u32 %s217, 1
        %s491 = smul.addr %s490, 8
        %s492 = scalar_lea.vmem [#allocation9], %s491
        // Predicated region
        $region57: #{tpu_custom_call.1} parent=43 // pred_check
          %p493 = pneg %p199
        $region58: #{tpu_custom_call.1} parent=43 // pred_check_branch
          %495 = sbr.rel (%p493) target = $region60
        $region59: #{tpu_custom_call.1} parent=43 // pred_region
          %s497 = ssub.s32 128, 128
          %498 = vsyncadd %s484, %s497
          %s499 = sadd.s32 %s34, %s33
          %s500 = smul.addr %s499, 128
          %s501 = scalar_lea.hbm %s6, %s500
          %s503 = sshll.u32 %s487, 4
          %s504 = int_to_ptr.vmem [resolvable:$true] %s503
          %506 = dma.vmem_to_hbm [thread:$0]  %s504, 128, %s501, %s484
        $region60: #{tpu_custom_call.1} parent=43 // pred_fallthru
          _
        // Predicated region
        $region61: #{tpu_custom_call.1} parent=43 // pred_check
          %p507 = pneg %p227
        $region62: #{tpu_custom_call.1} parent=43 // pred_check_branch
          %509 = sbr.rel (%p507) target = $region64
        $region63: #{tpu_custom_call.1} parent=43 // pred_region
          %s511 = ssub.s32 128, 128
          %512 = vsyncadd %s489, %s511
          %s513 = sadd.s32 %s34, %s33
          %s514 = smul.addr %s513, 128
          %s515 = scalar_lea.hbm %s7, %s514
          %s517 = sshll.u32 %s492, 4
          %s518 = int_to_ptr.vmem [resolvable:$true] %s517
          %520 = dma.vmem_to_hbm [thread:$0]  %s518, 128, %s515, %s489
        $region64: #{tpu_custom_call.1} parent=43 // pred_fallthru
          _
      $region44: #{tpu_custom_call.1} parent=5 // pred_fallthru
        _
      %p521 = scmp.le.s32.totalorder 2, %s24
      // Predicated region
      $region65: #{tpu_custom_call.1} parent=5 // pred_check
        %p522 = pneg %p521
      $region66: #{tpu_custom_call.1} parent=5 // pred_check_branch
        %524 = sbr.rel (%p522) target = $region68
      $region67: #{tpu_custom_call.1} parent=5 // pred_region
        %s525 = ssub.s32 %s24, 2
        // Predicated region
        $region69: #{tpu_custom_call.1} parent=67 // pred_check
          %p526 = pneg %p205
        $region70: #{tpu_custom_call.1} parent=67 // pred_check_branch
          %528 = sbr.rel (%p526) target = $region72
        $region71: #{tpu_custom_call.1} parent=67 // pred_region
          %s529 = sand.u32 %s190, 1
          %s530 = scalar_lea.sflag [#allocation4], %s529
          %s531 = sand.u32 %s190, 1
          %s532 = smul.addr %s531, 8
          %s533 = scalar_lea.vmem [#allocation8], %s532
          %534 = dma.done %s530, 128
        $region72: #{tpu_custom_call.1} parent=67 // pred_fallthru
          _
        // Predicated region
        $region73: #{tpu_custom_call.1} parent=67 // pred_check
          %p535 = pneg %p233
        $region74: #{tpu_custom_call.1} parent=67 // pred_check_branch
          %537 = sbr.rel (%p535) target = $region76
        $region75: #{tpu_custom_call.1} parent=67 // pred_region
          %s538 = sand.u32 %s218, 1
          %s539 = scalar_lea.sflag [#allocation10], %s538
          %s540 = sand.u32 %s218, 1
          %s541 = smul.addr %s540, 8
          %s542 = scalar_lea.vmem [#allocation9], %s541
          %543 = dma.done %s539, 128
        $region76: #{tpu_custom_call.1} parent=67 // pred_fallthru
          _
      $region68: #{tpu_custom_call.1} parent=5 // pred_fallthru
        _
    $region6: #{tpu_custom_call.1} parent=1 // loop_footer
      %s28 = sadd.s32 1, %s24
    $region7: #{tpu_custom_call.1} parent=1 // loop_footer_branch
      %23 = sbr.rel target = $region3
    $region8: #{tpu_custom_call.1} parent=1 // loop_exit
      _
    %544 = vsyncpa [#allocation3], 1
    %s545 = scalar_lea.sflag [#allocation3], 1
    %546 = vsyncpa %s545, 1
    %547 = vsyncpa [#allocation6], 1
    %548 = vsyncpa [#allocation4], 1
    %s549 = scalar_lea.sflag [#allocation4], 1
    %550 = vsyncpa %s549, 1
    %551 = vsyncpa [#allocation10], 1
    %s552 = scalar_lea.sflag [#allocation10], 1
    %553 = vsyncpa %s552, 1

</llo_original>
